<compile_context>
chip_gen: v7x
topology: tpu7x:2x2x1
jax: 0.10.0
libtpu: 0.0.40
codegen_flags: <defaults>
</compile_context>

<pallas_src>
import functools

import jax
import jax.numpy as jnp
import numpy as np
from jax.experimental import pallas as pl
from jax.experimental.pallas import tpu as pltpu


_PKEYS = ("w1", "b1", "w2", "b2", "w3", "b3", "wl", "bl", "wms", "bms")


# ----------------------------------------------------------------------------
# Pallas kernel: one batch tile end-to-end (5 matmuls, all with M = TB).
# ----------------------------------------------------------------------------
def encoder_kernel(z_size,
                   x_ref,
                   w1_ref, b1_ref,
                   w2_ref, b2_ref,
                   w3_ref, b3_ref,
                   wl_ref, bl_ref,
                   wms_ref, bms_ref,
                   out_ref):
    x = x_ref[...]                                                  # [TB, 180]

    h = jnp.maximum(jnp.dot(x, w1_ref[...],
                            preferred_element_type=jnp.float32) + b1_ref[...], 0.0)
    h = jnp.maximum(jnp.dot(h, w2_ref[...],
                            preferred_element_type=jnp.float32) + b2_ref[...], 0.0)
    h = jnp.maximum(jnp.dot(h, w3_ref[...],
                            preferred_element_type=jnp.float32) + b3_ref[...], 0.0)
    h = jnp.maximum(jnp.dot(h, wl_ref[...],
                            preferred_element_type=jnp.float32) + bl_ref[...], 0.0)

    # Fused heads: lanes [0, Z) = mean, lanes [Z, 2Z) = pre-softplus sigma.
    ms = jnp.dot(h, wms_ref[...],
                 preferred_element_type=jnp.float32) + bms_ref[...]   # [TB, 2Z]

    # Numerically stable softplus: log(1+exp(x)) -> x for large x.
    sp = jnp.where(ms > 20.0, ms, jnp.log(1.0 + jnp.exp(jnp.minimum(ms, 20.0))))
    lane = jax.lax.broadcasted_iota(jnp.int32, ms.shape, dimension=1)

    # Single lane-contiguous store per grid step: [TB, 2Z] = [mean | ln_var].
    out_ref[...] = jnp.where(lane >= z_size, sp, ms)


# ----------------------------------------------------------------------------
# One-time parameter re-layout (host side, outside the per-call path).
# ----------------------------------------------------------------------------
def _conv_band(w, l_in, out_order):
    """Fold Conv1d weight [C_out, C_in, K] into a dense [L_in*C_in, L_out*C_out]
    matrix acting on the per-sample length-major flattened activation."""
    c_out, c_in, k = w.shape
    l_out = l_in - k + 1
    big = np.zeros((l_in * c_in, l_out * c_out), np.float32)
    for l in range(l_out):
        for kk in range(k):
            for ci in range(c_in):
                for co in range(c_out):
                    col = (l * c_out + co) if out_order == "lc" else (co * l_out + l)
                    big[(l + kk) * c_in + ci, col] = w[co, ci, kk]
    return big


def prepare_params(raw, dtype=jnp.float32):
    """raw: PyTorch-shaped params (jnp or np arrays).  Runs once.

    Set dtype=jnp.bfloat16 to halve HBM traffic for x/weights (accumulation
    stays f32 in-kernel); keep f32 when tight (1e-4) parity is required.
    """
    c1_w = np.asarray(raw["c1_w"], np.float32)   # [2, C0, 2]
    c2_w = np.asarray(raw["c2_w"], np.float32)   # [3, 2, 3]
    c3_w = np.asarray(raw["c3_w"], np.float32)   # [4, 3, 4]
    lin_w = np.asarray(raw["lin_w"], np.float32)  # [H, 36]
    mu_w = np.asarray(raw["mu_w"], np.float32)    # [Z, H]
    sg_w = np.asarray(raw["sg_w"], np.float32)    # [Z, H]
    mu_b = np.asarray(raw["mu_b"], np.float32)    # [Z]
    sg_b = np.asarray(raw["sg_b"], np.float32)    # [Z]

    # conv-small static contract: fail loudly on mismatched configs.
    assert c1_w.shape[0] == 2 and c1_w.shape[2] == 2, c1_w.shape
    assert c2_w.shape == (3, 2, 3), c2_w.shape
    assert c3_w.shape == (4, 3, 4), c3_w.shape
    assert lin_w.shape[1] == 36, lin_w.shape

    p = {
        "w1": _conv_band(c1_w, 15, "lc"),                       # [15*C0, 28]
        "b1": np.tile(np.asarray(raw["c1_b"], np.float32), 14)[None, :],   # [1, 28]
        "w2": _conv_band(c2_w, 14, "lc"),                       # [28, 36]
        "b2": np.tile(np.asarray(raw["c2_b"], np.float32), 12)[None, :],   # [1, 36]
        # conv3 output emitted directly in torch's Flatten order (c*9 + l).
        "w3": _conv_band(c3_w, 12, "cl"),                       # [36, 36]
        "b3": np.repeat(np.asarray(raw["c3_b"], np.float32), 9)[None, :],  # [1, 36]
        "wl": lin_w.T,                                          # [36, H]
        "bl": np.asarray(raw["lin_b"], np.float32)[None, :],    # [1, H]
        # Fused mu|sigma head: one matmul, one bias, one store.
        "wms": np.concatenate([mu_w.T, sg_w.T], axis=1),        # [H, 2Z]
        "bms": np.concatenate([mu_b, sg_b])[None, :],           # [1, 2Z]
    }
    return {k: jnp.asarray(v, dtype) for k, v in p.items()}


# ----------------------------------------------------------------------------
# Wrapper: batch grid + double-buffered BlockSpecs, no input padding.
# ----------------------------------------------------------------------------
def _round_up(v, m):
    return ((v + m - 1) // m) * m


def _choose_tb(batch, tb):
    """Batch tile: large enough to amortize per-step overhead, capped at `tb`
    (4096 default is safe inside v5e's 16 MiB scoped VMEM), and small enough
    that the grid has >= 2 steps so both v7x TensorCores get work."""
    if batch <= 8:
        return batch                       # single tiny block
    return max(8, min(tb, _round_up(-(-batch // 2), 8)))


def encoder_forward(x, p, *, tb=4096):
    """x: [B, seq_len, token_cnt] float.  p: output of prepare_params."""
    B, L, C = x.shape
    assert L == 15, f"conv-small requires seq_len=15 (Linear(36,H)); got {L}"
    LC = L * C
    assert LC == p["w1"].shape[0], (x.shape, p["w1"].shape)
    Z = p["wms"].shape[1] // 2

    # Lane-dense [B, 180] slab; dtype follows the prepared weights.
    x_flat = x.reshape(B, LC).astype(p["w1"].dtype)

    TB = _choose_tb(B, tb)
    nb = -(-B // TB)            # cdiv: ragged last block reads garbage rows
    Bp = nb * TB                # pad ONLY the output allocation (tiny)

    weights = [p[k] for k in _PKEYS]
    kernel = functools.partial(encoder_kernel, Z)

    out = pl.pallas_call(
        kernel,
        out_shape=jax.ShapeDtypeStruct((Bp, 2 * Z), jnp.float32),
        grid_spec=pltpu.PrefetchScalarGridSpec(
            num_scalar_prefetch=0,
            grid=(nb,),
            in_specs=[pl.BlockSpec((TB, LC), lambda i: (i, 0))]
                     + [pl.BlockSpec(a.shape, lambda i: (0, 0)) for a in weights],
            out_specs=pl.BlockSpec((TB, 2 * Z), lambda i: (i, 0)),
        ),
        # Batch axis is embarrassingly parallel (2 TCs on v7x).  Per-tile VMEM
        # at TB=4096 is ~6.5 MiB double-buffered: fits all generations'
        # scoped-VMEM defaults, so no vmem_limit_bytes override is needed.
        compiler_params=pltpu.CompilerParams(
            dimension_semantics=("parallel",)),
    )(x_flat, *weights)

    # Rows >= B (ragged tail) are computed on garbage and dropped here.
    return out[:B, :Z], out[:B, Z:]


# ----------------------------------------------------------------------------
# Pure-JAX reference (mirrors the PyTorch forward, original layouts)
# ----------------------------------------------------------------------------
def reference(x, raw):
    xc = jnp.transpose(x, (0, 2, 1))  # x.permute(0, 2, 1) -> [B, C, L]

    def conv1d(xin, w, b):            # xin [B,Cin,L], w [Cout,Cin,K]
        K = w.shape[2]
        l_out = xin.shape[2] - K + 1
        y = b[None, :, None]
        for k in range(K):
            y = y + jnp.einsum('bcl,oc->bol', xin[:, :, k:k + l_out], w[:, :, k])
        return y

    h = jax.nn.relu(conv1d(xc, raw["c1_w"], raw["c1_b"]))
    h = jax.nn.relu(conv1d(h, raw["c2_w"], raw["c2_b"]))
    h = jax.nn.relu(conv1d(h, raw["c3_w"], raw["c3_b"]))
    h = h.reshape(h.shape[0], -1)                       # Flatten (C-major)
    h = jax.nn.relu(h @ raw["lin_w"].T + raw["lin_b"])  # Linear(36, H) + ReLU
    mean = h @ raw["mu_w"].T + raw["mu_b"]
    ln_var = jnp.log(1.0 + jnp.exp(h @ raw["sg_w"].T + raw["sg_b"]))
    return mean, ln_var


# ----------------------------------------------------------------------------
# Deterministic parameter init + run
# ----------------------------------------------------------------------------
def init_params(key, token_cnt, hidden, z_size):
    ks = jax.random.split(key, 12)

    def unif(k, shape, fan_in):
        bound = 1.0 / np.sqrt(fan_in)
        return jax.random.uniform(k, shape, jnp.float32, -bound, bound)

    return {
        "c1_w": unif(ks[0], (2, token_cnt, 2), token_cnt * 2),
        "c1_b": unif(ks[1], (2,), token_cnt * 2),
        "c2_w": unif(ks[2], (3, 2, 3), 2 * 3),
        "c2_b": unif(ks[3], (3,), 2 * 3),
        "c3_w": unif(ks[4], (4, 3, 4), 3 * 4),
        "c3_b": unif(ks[5], (4,), 3 * 4),
        "lin_w": unif(ks[6], (hidden, 36), 36),
        "lin_b": unif(ks[7], (hidden,), 36),
        "mu_w": unif(ks[8], (z_size, hidden), hidden),
        "mu_b": unif(ks[9], (z_size,), hidden),
        "sg_w": unif(ks[10], (z_size, hidden), hidden),
        "sg_b": unif(ks[11], (z_size,), hidden),
    }


if __name__ == "__main__":
    SEQ_LEN, TOKEN_CNT = 15, 12   # seq_len=15 required by Linear(36, H)
    HIDDEN, Z = 32, 8

    key = jax.random.PRNGKey(0)
    k_x, k_x2, k_p = jax.random.split(key, 3)
    raw = init_params(k_p, TOKEN_CNT, HIDDEN, Z)
    prepped = prepare_params(raw)            # one-time host-side re-layout

    fwd = jax.jit(lambda xx: encoder_forward(xx, prepped))

    # 1) Even batch: B=16 -> TB=8, grid=(2,) (both v7x TCs get a step).
    x = jax.random.uniform(k_x, (16, SEQ_LEN, TOKEN_CNT), jnp.float32)
    mean, ln_var = jax.block_until_ready(fwd(x))
    ref_mean, ref_lnvar = reference(x, raw)
    np.testing.assert_allclose(np.asarray(mean), np.asarray(ref_mean),
                               rtol=1e-4, atol=1e-4)
    np.testing.assert_allclose(np.asarray(ln_var), np.asarray(ref_lnvar),
                               rtol=1e-4, atol=1e-4)

    # 2) Ragged batch: B=13 -> TB=8, grid=(2,), partial last block, NO input pad.
    x2 = jax.random.uniform(k_x2, (13, SEQ_LEN, TOKEN_CNT), jnp.float32)
    mean2, ln_var2 = jax.block_until_ready(fwd(x2))
    ref_mean2, ref_lnvar2 = reference(x2, raw)
    np.testing.assert_allclose(np.asarray(mean2), np.asarray(ref_mean2),
                               rtol=1e-4, atol=1e-4)
    np.testing.assert_allclose(np.asarray(ln_var2), np.asarray(ref_lnvar2),
                               rtol=1e-4, atol=1e-4)

    print("KERNEL_OK")
</pallas_src>

<mosaic_0001>
module attributes {stable_mosaic.version = 11 : i64} {
  func.func @encoder_kernel(%arg0: i32, %arg1: memref<8x180xf32, #tpu.memory_space<vmem>>, %arg2: memref<180x28xf32, #tpu.memory_space<vmem>>, %arg3: memref<1x28xf32, #tpu.memory_space<vmem>>, %arg4: memref<28x36xf32, #tpu.memory_space<vmem>>, %arg5: memref<1x36xf32, #tpu.memory_space<vmem>>, %arg6: memref<36x36xf32, #tpu.memory_space<vmem>>, %arg7: memref<1x36xf32, #tpu.memory_space<vmem>>, %arg8: memref<36x32xf32, #tpu.memory_space<vmem>>, %arg9: memref<1x32xf32, #tpu.memory_space<vmem>>, %arg10: memref<32x16xf32, #tpu.memory_space<vmem>>, %arg11: memref<1x16xf32, #tpu.memory_space<vmem>>, %arg12: memref<8x16xf32, #tpu.memory_space<vmem>>) attributes {dimension_semantics = [#tpu.dimension_semantics<parallel>], iteration_bounds = array<i64: 2>, scalar_prefetch = 0 : i64, scratch_operands = 0 : i64, tpu.core_type = #tpu.core_type<tc>, window_params = [{transform_indices = @transform_0, window_bounds = array<i64: 8, 180>}, {pipeline_mode = #tpu.pipeline_mode<synchronous>, transform_indices = @transform_1, window_bounds = array<i64: 180, 28>}, {pipeline_mode = #tpu.pipeline_mode<synchronous>, transform_indices = @transform_2, window_bounds = array<i64: 1, 28>}, {pipeline_mode = #tpu.pipeline_mode<synchronous>, transform_indices = @transform_3, window_bounds = array<i64: 28, 36>}, {pipeline_mode = #tpu.pipeline_mode<synchronous>, transform_indices = @transform_4, window_bounds = array<i64: 1, 36>}, {pipeline_mode = #tpu.pipeline_mode<synchronous>, transform_indices = @transform_5, window_bounds = array<i64: 36, 36>}, {pipeline_mode = #tpu.pipeline_mode<synchronous>, transform_indices = @transform_6, window_bounds = array<i64: 1, 36>}, {pipeline_mode = #tpu.pipeline_mode<synchronous>, transform_indices = @transform_7, window_bounds = array<i64: 36, 32>}, {pipeline_mode = #tpu.pipeline_mode<synchronous>, transform_indices = @transform_8, window_bounds = array<i64: 1, 32>}, {pipeline_mode = #tpu.pipeline_mode<synchronous>, transform_indices = @transform_9, window_bounds = array<i64: 32, 16>}, {pipeline_mode = #tpu.pipeline_mode<synchronous>, transform_indices = @transform_10, window_bounds = array<i64: 1, 16>}, {transform_indices = @transform_11, window_bounds = array<i64: 8, 16>}]} {
    %c0 = arith.constant 0 : index
    %c0_0 = arith.constant 0 : index
    %0 = vector.load %arg1[%c0, %c0_0] : memref<8x180xf32, #tpu.memory_space<vmem>>, vector<8x180xf32>
    %c0_1 = arith.constant 0 : index
    %c0_2 = arith.constant 0 : index
    %1 = vector.load %arg2[%c0_1, %c0_2] : memref<180x28xf32, #tpu.memory_space<vmem>>, vector<180x28xf32>
    %cst = arith.constant dense<0.000000e+00> : vector<8x28xf32>
    %2 = tpu.matmul %0, %1, %cst {dimension_numbers = #tpu.dot_dimension_numbers<[1], [0], [0], [1], [0, 0, 1, 1], [], []>} : vector<8x180xf32>, vector<180x28xf32>, vector<8x28xf32> -> vector<8x28xf32>
    %c0_3 = arith.constant 0 : index
    %c0_4 = arith.constant 0 : index
    %3 = vector.load %arg3[%c0_3, %c0_4] : memref<1x28xf32, #tpu.memory_space<vmem>>, vector<1x28xf32>
    %4 = vector.broadcast %3 : vector<1x28xf32> to vector<8x28xf32>
    %5 = arith.addf %2, %4 : vector<8x28xf32>
    %cst_5 = arith.constant 0.000000e+00 : f32
    %6 = vector.broadcast %cst_5 : f32 to vector<8x28xf32>
    %7 = arith.maximumf %5, %6 : vector<8x28xf32>
    %c0_6 = arith.constant 0 : index
    %c0_7 = arith.constant 0 : index
    %8 = vector.load %arg4[%c0_6, %c0_7] : memref<28x36xf32, #tpu.memory_space<vmem>>, vector<28x36xf32>
    %cst_8 = arith.constant dense<0.000000e+00> : vector<8x36xf32>
    %9 = tpu.matmul %7, %8, %cst_8 {dimension_numbers = #tpu.dot_dimension_numbers<[1], [0], [0], [1], [0, 0, 1, 1], [], []>} : vector<8x28xf32>, vector<28x36xf32>, vector<8x36xf32> -> vector<8x36xf32>
    %c0_9 = arith.constant 0 : index
    %c0_10 = arith.constant 0 : index
    %10 = vector.load %arg5[%c0_9, %c0_10] : memref<1x36xf32, #tpu.memory_space<vmem>>, vector<1x36xf32>
    %11 = vector.broadcast %10 : vector<1x36xf32> to vector<8x36xf32>
    %12 = arith.addf %9, %11 : vector<8x36xf32>
    %cst_11 = arith.constant 0.000000e+00 : f32
    %13 = vector.broadcast %cst_11 : f32 to vector<8x36xf32>
    %14 = arith.maximumf %12, %13 : vector<8x36xf32>
    %c0_12 = arith.constant 0 : index
    %c0_13 = arith.constant 0 : index
    %15 = vector.load %arg6[%c0_12, %c0_13] : memref<36x36xf32, #tpu.memory_space<vmem>>, vector<36x36xf32>
    %cst_14 = arith.constant dense<0.000000e+00> : vector<8x36xf32>
    %16 = tpu.matmul %14, %15, %cst_14 {dimension_numbers = #tpu.dot_dimension_numbers<[1], [0], [0], [1], [0, 0, 1, 1], [], []>} : vector<8x36xf32>, vector<36x36xf32>, vector<8x36xf32> -> vector<8x36xf32>
    %c0_15 = arith.constant 0 : index
    %c0_16 = arith.constant 0 : index
    %17 = vector.load %arg7[%c0_15, %c0_16] : memref<1x36xf32, #tpu.memory_space<vmem>>, vector<1x36xf32>
    %18 = vector.broadcast %17 : vector<1x36xf32> to vector<8x36xf32>
    %19 = arith.addf %16, %18 : vector<8x36xf32>
    %cst_17 = arith.constant 0.000000e+00 : f32
    %20 = vector.broadcast %cst_17 : f32 to vector<8x36xf32>
    %21 = arith.maximumf %19, %20 : vector<8x36xf32>
    %c0_18 = arith.constant 0 : index
    %c0_19 = arith.constant 0 : index
    %22 = vector.load %arg8[%c0_18, %c0_19] : memref<36x32xf32, #tpu.memory_space<vmem>>, vector<36x32xf32>
    %cst_20 = arith.constant dense<0.000000e+00> : vector<8x32xf32>
    %23 = tpu.matmul %21, %22, %cst_20 {dimension_numbers = #tpu.dot_dimension_numbers<[1], [0], [0], [1], [0, 0, 1, 1], [], []>} : vector<8x36xf32>, vector<36x32xf32>, vector<8x32xf32> -> vector<8x32xf32>
    %c0_21 = arith.constant 0 : index
    %c0_22 = arith.constant 0 : index
    %24 = vector.load %arg9[%c0_21, %c0_22] : memref<1x32xf32, #tpu.memory_space<vmem>>, vector<1x32xf32>
    %25 = vector.broadcast %24 : vector<1x32xf32> to vector<8x32xf32>
    %26 = arith.addf %23, %25 : vector<8x32xf32>
    %cst_23 = arith.constant 0.000000e+00 : f32
    %27 = vector.broadcast %cst_23 : f32 to vector<8x32xf32>
    %28 = arith.maximumf %26, %27 : vector<8x32xf32>
    %c0_24 = arith.constant 0 : index
    %c0_25 = arith.constant 0 : index
    %29 = vector.load %arg10[%c0_24, %c0_25] : memref<32x16xf32, #tpu.memory_space<vmem>>, vector<32x16xf32>
    %cst_26 = arith.constant dense<0.000000e+00> : vector<8x16xf32>
    %30 = tpu.matmul %28, %29, %cst_26 {dimension_numbers = #tpu.dot_dimension_numbers<[1], [0], [0], [1], [0, 0, 1, 1], [], []>} : vector<8x32xf32>, vector<32x16xf32>, vector<8x16xf32> -> vector<8x16xf32>
    %c0_27 = arith.constant 0 : index
    %c0_28 = arith.constant 0 : index
    %31 = vector.load %arg11[%c0_27, %c0_28] : memref<1x16xf32, #tpu.memory_space<vmem>>, vector<1x16xf32>
    %32 = vector.broadcast %31 : vector<1x16xf32> to vector<8x16xf32>
    %33 = arith.addf %30, %32 : vector<8x16xf32>
    %cst_29 = arith.constant 2.000000e+01 : f32
    %34 = vector.broadcast %cst_29 : f32 to vector<8x16xf32>
    %35 = arith.cmpf ogt, %33, %34 : vector<8x16xf32>
    %cst_30 = arith.constant 2.000000e+01 : f32
    %36 = vector.broadcast %cst_30 : f32 to vector<8x16xf32>
    %37 = arith.minimumf %33, %36 : vector<8x16xf32>
    %38 = math.exp %37 : vector<8x16xf32>
    %cst_31 = arith.constant 1.000000e+00 : f32
    %39 = vector.broadcast %cst_31 : f32 to vector<8x16xf32>
    %40 = arith.addf %39, %38 : vector<8x16xf32>
    %41 = math.log %40 : vector<8x16xf32>
    %42 = arith.select %35, %33, %41 : vector<8x16xi1>, vector<8x16xf32>
    %43 = tpu.iota {dimensions = array<i32: 1>} : vector<8x16xi32>
    %c8_i32 = arith.constant 8 : i32
    %44 = vector.broadcast %c8_i32 : i32 to vector<8x16xi32>
    %45 = arith.cmpi sge, %43, %44 : vector<8x16xi32>
    %46 = arith.select %45, %42, %33 : vector<8x16xi1>, vector<8x16xf32>
    %c0_32 = arith.constant 0 : index
    %c0_33 = arith.constant 0 : index
    %47 = vector.load %arg12[%c0_32, %c0_33] : memref<8x16xf32, #tpu.memory_space<vmem>>, vector<8x16xf32>
    tpu.vector_store %arg12[%c0_32, %c0_33], %46 {strides = array<i32>} : memref<8x16xf32, #tpu.memory_space<vmem>>, vector<8x16xf32>,
    return
  }
  func.func @transform_0(%arg0: i32) -> (i32, i32) {
    %c0_i32 = arith.constant 0 : i32
    %c0_i32_0 = arith.constant 0 : i32
    return %arg0, %c0_i32 : i32, i32
  }
  func.func @transform_1(%arg0: i32) -> (i32, i32) {
    %c0_i32 = arith.constant 0 : i32
    %c0_i32_0 = arith.constant 0 : i32
    %c0_i32_1 = arith.constant 0 : i32
    return %c0_i32, %c0_i32_0 : i32, i32
  }
  func.func @transform_2(%arg0: i32) -> (i32, i32) {
    %c0_i32 = arith.constant 0 : i32
    %c0_i32_0 = arith.constant 0 : i32
    %c0_i32_1 = arith.constant 0 : i32
    return %c0_i32, %c0_i32_0 : i32, i32
  }
  func.func @transform_3(%arg0: i32) -> (i32, i32) {
    %c0_i32 = arith.constant 0 : i32
    %c0_i32_0 = arith.constant 0 : i32
    %c0_i32_1 = arith.constant 0 : i32
    return %c0_i32, %c0_i32_0 : i32, i32
  }
  func.func @transform_4(%arg0: i32) -> (i32, i32) {
    %c0_i32 = arith.constant 0 : i32
    %c0_i32_0 = arith.constant 0 : i32
    %c0_i32_1 = arith.constant 0 : i32
    return %c0_i32, %c0_i32_0 : i32, i32
  }
  func.func @transform_5(%arg0: i32) -> (i32, i32) {
    %c0_i32 = arith.constant 0 : i32
    %c0_i32_0 = arith.constant 0 : i32
    %c0_i32_1 = arith.constant 0 : i32
    return %c0_i32, %c0_i32_0 : i32, i32
  }
  func.func @transform_6(%arg0: i32) -> (i32, i32) {
    %c0_i32 = arith.constant 0 : i32
    %c0_i32_0 = arith.constant 0 : i32
    %c0_i32_1 = arith.constant 0 : i32
    return %c0_i32, %c0_i32_0 : i32, i32
  }
  func.func @transform_7(%arg0: i32) -> (i32, i32) {
    %c0_i32 = arith.constant 0 : i32
    %c0_i32_0 = arith.constant 0 : i32
    %c0_i32_1 = arith.constant 0 : i32
    return %c0_i32, %c0_i32_0 : i32, i32
  }
  func.func @transform_8(%arg0: i32) -> (i32, i32) {
    %c0_i32 = arith.constant 0 : i32
    %c0_i32_0 = arith.constant 0 : i32
    %c0_i32_1 = arith.constant 0 : i32
    return %c0_i32, %c0_i32_0 : i32, i32
  }
  func.func @transform_9(%arg0: i32) -> (i32, i32) {
    %c0_i32 = arith.constant 0 : i32
    %c0_i32_0 = arith.constant 0 : i32
    %c0_i32_1 = arith.constant 0 : i32
    return %c0_i32, %c0_i32_0 : i32, i32
  }
  func.func @transform_10(%arg0: i32) -> (i32, i32) {
    %c0_i32 = arith.constant 0 : i32
    %c0_i32_0 = arith.constant 0 : i32
    %c0_i32_1 = arith.constant 0 : i32
    return %c0_i32, %c0_i32_0 : i32, i32
  }
  func.func @transform_11(%arg0: i32) -> (i32, i32) {
    %c0_i32 = arith.constant 0 : i32
    %c0_i32_0 = arith.constant 0 : i32
    return %arg0, %c0_i32 : i32, i32
  }
}

</mosaic_0001>

<llo_original>
// kernel: _lambda_.1
$region0: #{_lambda_.1}
  #allocation0 [shape = 'u32[]', space=smem, size = 0x4, offset = 0x4, fixed_abs, tag = 'smem constant byte address 0x4 - core index']
  #allocation1 [shape = 'u32[144,128]{1,0:T(1,128)}', space=vmem, size = 0x12000, scoped, tag = 'internal scratch']
  %s0 = inlined_call_operand.vmem [shape: f32[16,180], index: 0, kind: input, shape index: {}]
  %s1 = inlined_call_operand.vmem [shape: f32[180,28], index: 1, kind: input, shape index: {}]
  %s2 = inlined_call_operand.vmem [shape: f32[1,28], index: 2, kind: input, shape index: {}]
  %s3 = inlined_call_operand.vmem [shape: f32[28,36], index: 3, kind: input, shape index: {}]
  %s4 = inlined_call_operand.vmem [shape: f32[1,36], index: 4, kind: input, shape index: {}]
  %s5 = inlined_call_operand.vmem [shape: f32[36,36], index: 5, kind: input, shape index: {}]
  %s6 = inlined_call_operand.vmem [shape: f32[1,36], index: 6, kind: input, shape index: {}]
  %s7 = inlined_call_operand.vmem [shape: f32[36,32], index: 7, kind: input, shape index: {}]
  %s8 = inlined_call_operand.vmem [shape: f32[1,32], index: 8, kind: input, shape index: {}]
  %s9 = inlined_call_operand.vmem [shape: f32[32,16], index: 9, kind: input, shape index: {}]
  %s10 = inlined_call_operand.vmem [shape: f32[1,16], index: 10, kind: input, shape index: {}]
  %s11 = inlined_call_operand.vmem [shape: f32[16,16], index: 11, kind: output, shape index: {}]
  %s12 = sld [smem:[#allocation0]]
  $region77: #{_lambda_.1} parent=0
    _
  %s14 = ssub.s32 1, %s12
  %s15 = scalar_select 0, %s14, %s12
  loop: start=0, step=1, limit=4
  $region2: #{_lambda_.1} parent=0 // loop_pre_header
    _
  $region3: #{_lambda_.1} parent=0 // loop_header
    %s17 = sphi 0, %s21
    %p18 = scmp.ge.s32.totalorder %s17, 4
    %s27 = sphi 0, %s29
    %s30 = sphi 0, %s27
    %s31 = sphi 0, %s30
    %s47 = sphi 0, %s31
    %s51 = sphi 0, %s51
    %s53 = sphi 0, %s51
    %s54 = sphi 0, %s53
    %s68 = sphi 0, %s54
    %s72 = sphi 0, %s72
    %s74 = sphi 0, %s72
    %s75 = sphi 0, %s74
    %s89 = sphi 0, %s75
    %s93 = sphi 0, %s93
    %s95 = sphi 0, %s93
    %s96 = sphi 0, %s95
    %s110 = sphi 0, %s96
    %s114 = sphi 0, %s114
    %s116 = sphi 0, %s114
    %s117 = sphi 0, %s116
    %s131 = sphi 0, %s117
    %s135 = sphi 0, %s135
    %s137 = sphi 0, %s135
    %s138 = sphi 0, %s137
    %s152 = sphi 0, %s138
    %s156 = sphi 0, %s156
    %s158 = sphi 0, %s156
    %s159 = sphi 0, %s158
    %s173 = sphi 0, %s159
    %s177 = sphi 0, %s177
    %s179 = sphi 0, %s177
    %s180 = sphi 0, %s179
    %s194 = sphi 0, %s180
    %s198 = sphi 0, %s198
    %s200 = sphi 0, %s198
    %s201 = sphi 0, %s200
    %s215 = sphi 0, %s201
    %s219 = sphi 0, %s219
    %s221 = sphi 0, %s219
    %s222 = sphi 0, %s221
    %s236 = sphi 0, %s222
    %s240 = sphi 0, %s240
    %s242 = sphi 0, %s240
    %s243 = sphi 0, %s242
    %s257 = sphi 0, %s243
    %s263 = sphi 0, %s265
    %s266 = sphi 0, %s263
    %s267 = sphi 0, %s266
    %s283 = sphi 0, %s267
  $region4: #{_lambda_.1} parent=0 // loop_header_branch
    %20 = sbr.rel (%p18) target = $region8
  $region5: #{_lambda_.1} parent=0 // loop_body
    %s22 = ssub.s32 %s17, 1
    %s23 = ssub.s32 %s17, 2
    %s24 = sadd.s32 %s17, 1
    %s25 = ssub.s32 %s17, %s24
    %p26 = scmp.eq.s32.totalorder %s25, 0
    %s28 = sadd.s32 %s27, 1
    %s29 = scalar_select %p26, %s27, %s28
    %p32 = pneg %p26
    %p33 = scmp.eq.s32.totalorder %s17, 1
    %p34 = por %p32, %p33
    %p35 = scmp.ne.s32.totalorder %s27, %s30
    %p36 = scmp.eq.s32.totalorder %s17, 0
    %p37 = por %p35, %p36
    %p38 = scmp.ne.s32.totalorder %s27, %s30
    %p39 = scmp.eq.s32.totalorder %s22, 1
    %p40 = por %p38, %p39
    %p41 = scmp.ne.s32.totalorder %s30, %s31
    %p42 = scmp.eq.s32.totalorder %s22, 0
    %p43 = por %p41, %p42
    %p44 = scmp.ne.s32.totalorder %s30, %s31
    %p45 = scmp.eq.s32.totalorder %s23, 1
    %p46 = por %p44, %p45
    %p48 = scmp.ne.s32.totalorder %s31, %s47
    %p49 = scmp.eq.s32.totalorder %s23, 0
    %p50 = por %p48, %p49
    %s52 = sadd.s32 %s51, 1
    %p55 = scmp.eq.s32.totalorder %s17, 1
    %p56 = scmp.ne.s32.totalorder %s51, %s53
    %p57 = scmp.eq.s32.totalorder %s17, 0
    %p58 = por %p56, %p57
    %p59 = scmp.ne.s32.totalorder %s51, %s53
    %p60 = scmp.eq.s32.totalorder %s22, 1
    %p61 = por %p59, %p60
    %p62 = scmp.ne.s32.totalorder %s53, %s54
    %p63 = scmp.eq.s32.totalorder %s22, 0
    %p64 = por %p62, %p63
    %p65 = scmp.ne.s32.totalorder %s53, %s54
    %p66 = scmp.eq.s32.totalorder %s23, 1
    %p67 = por %p65, %p66
    %p69 = scmp.ne.s32.totalorder %s54, %s68
    %p70 = scmp.eq.s32.totalorder %s23, 0
    %p71 = por %p69, %p70
    %s73 = sadd.s32 %s72, 1
    %p76 = scmp.eq.s32.totalorder %s17, 1
    %p77 = scmp.ne.s32.totalorder %s72, %s74
    %p78 = scmp.eq.s32.totalorder %s17, 0
    %p79 = por %p77, %p78
    %p80 = scmp.ne.s32.totalorder %s72, %s74
    %p81 = scmp.eq.s32.totalorder %s22, 1
    %p82 = por %p80, %p81
    %p83 = scmp.ne.s32.totalorder %s74, %s75
    %p84 = scmp.eq.s32.totalorder %s22, 0
    %p85 = por %p83, %p84
    %p86 = scmp.ne.s32.totalorder %s74, %s75
    %p87 = scmp.eq.s32.totalorder %s23, 1
    %p88 = por %p86, %p87
    %p90 = scmp.ne.s32.totalorder %s75, %s89
    %p91 = scmp.eq.s32.totalorder %s23, 0
    %p92 = por %p90, %p91
    %s94 = sadd.s32 %s93, 1
    %p97 = scmp.eq.s32.totalorder %s17, 1
    %p98 = scmp.ne.s32.totalorder %s93, %s95
    %p99 = scmp.eq.s32.totalorder %s17, 0
    %p100 = por %p98, %p99
    %p101 = scmp.ne.s32.totalorder %s93, %s95
    %p102 = scmp.eq.s32.totalorder %s22, 1
    %p103 = por %p101, %p102
    %p104 = scmp.ne.s32.totalorder %s95, %s96
    %p105 = scmp.eq.s32.totalorder %s22, 0
    %p106 = por %p104, %p105
    %p107 = scmp.ne.s32.totalorder %s95, %s96
    %p108 = scmp.eq.s32.totalorder %s23, 1
    %p109 = por %p107, %p108
    %p111 = scmp.ne.s32.totalorder %s96, %s110
    %p112 = scmp.eq.s32.totalorder %s23, 0
    %p113 = por %p111, %p112
    %s115 = sadd.s32 %s114, 1
    %p118 = scmp.eq.s32.totalorder %s17, 1
    %p119 = scmp.ne.s32.totalorder %s114, %s116
    %p120 = scmp.eq.s32.totalorder %s17, 0
    %p121 = por %p119, %p120
    %p122 = scmp.ne.s32.totalorder %s114, %s116
    %p123 = scmp.eq.s32.totalorder %s22, 1
    %p124 = por %p122, %p123
    %p125 = scmp.ne.s32.totalorder %s116, %s117
    %p126 = scmp.eq.s32.totalorder %s22, 0
    %p127 = por %p125, %p126
    %p128 = scmp.ne.s32.totalorder %s116, %s117
    %p129 = scmp.eq.s32.totalorder %s23, 1
    %p130 = por %p128, %p129
    %p132 = scmp.ne.s32.totalorder %s117, %s131
    %p133 = scmp.eq.s32.totalorder %s23, 0
    %p134 = por %p132, %p133
    %s136 = sadd.s32 %s135, 1
    %p139 = scmp.eq.s32.totalorder %s17, 1
    %p140 = scmp.ne.s32.totalorder %s135, %s137
    %p141 = scmp.eq.s32.totalorder %s17, 0
    %p142 = por %p140, %p141
    %p143 = scmp.ne.s32.totalorder %s135, %s137
    %p144 = scmp.eq.s32.totalorder %s22, 1
    %p145 = por %p143, %p144
    %p146 = scmp.ne.s32.totalorder %s137, %s138
    %p147 = scmp.eq.s32.totalorder %s22, 0
    %p148 = por %p146, %p147
    %p149 = scmp.ne.s32.totalorder %s137, %s138
    %p150 = scmp.eq.s32.totalorder %s23, 1
    %p151 = por %p149, %p150
    %p153 = scmp.ne.s32.totalorder %s138, %s152
    %p154 = scmp.eq.s32.totalorder %s23, 0
    %p155 = por %p153, %p154
    %s157 = sadd.s32 %s156, 1
    %p160 = scmp.eq.s32.totalorder %s17, 1
    %p161 = scmp.ne.s32.totalorder %s156, %s158
    %p162 = scmp.eq.s32.totalorder %s17, 0
    %p163 = por %p161, %p162
    %p164 = scmp.ne.s32.totalorder %s156, %s158
    %p165 = scmp.eq.s32.totalorder %s22, 1
    %p166 = por %p164, %p165
    %p167 = scmp.ne.s32.totalorder %s158, %s159
    %p168 = scmp.eq.s32.totalorder %s22, 0
    %p169 = por %p167, %p168
    %p170 = scmp.ne.s32.totalorder %s158, %s159
    %p171 = scmp.eq.s32.totalorder %s23, 1
    %p172 = por %p170, %p171
    %p174 = scmp.ne.s32.totalorder %s159, %s173
    %p175 = scmp.eq.s32.totalorder %s23, 0
    %p176 = por %p174, %p175
    %s178 = sadd.s32 %s177, 1
    %p181 = scmp.eq.s32.totalorder %s17, 1
    %p182 = scmp.ne.s32.totalorder %s177, %s179
    %p183 = scmp.eq.s32.totalorder %s17, 0
    %p184 = por %p182, %p183
    %p185 = scmp.ne.s32.totalorder %s177, %s179
    %p186 = scmp.eq.s32.totalorder %s22, 1
    %p187 = por %p185, %p186
    %p188 = scmp.ne.s32.totalorder %s179, %s180
    %p189 = scmp.eq.s32.totalorder %s22, 0
    %p190 = por %p188, %p189
    %p191 = scmp.ne.s32.totalorder %s179, %s180
    %p192 = scmp.eq.s32.totalorder %s23, 1
    %p193 = por %p191, %p192
    %p195 = scmp.ne.s32.totalorder %s180, %s194
    %p196 = scmp.eq.s32.totalorder %s23, 0
    %p197 = por %p195, %p196
    %s199 = sadd.s32 %s198, 1
    %p202 = scmp.eq.s32.totalorder %s17, 1
    %p203 = scmp.ne.s32.totalorder %s198, %s200
    %p204 = scmp.eq.s32.totalorder %s17, 0
    %p205 = por %p203, %p204
    %p206 = scmp.ne.s32.totalorder %s198, %s200
    %p207 = scmp.eq.s32.totalorder %s22, 1
    %p208 = por %p206, %p207
    %p209 = scmp.ne.s32.totalorder %s200, %s201
    %p210 = scmp.eq.s32.totalorder %s22, 0
    %p211 = por %p209, %p210
    %p212 = scmp.ne.s32.totalorder %s200, %s201
    %p213 = scmp.eq.s32.totalorder %s23, 1
    %p214 = por %p212, %p213
    %p216 = scmp.ne.s32.totalorder %s201, %s215
    %p217 = scmp.eq.s32.totalorder %s23, 0
    %p218 = por %p216, %p217
    %s220 = sadd.s32 %s219, 1
    %p223 = scmp.eq.s32.totalorder %s17, 1
    %p224 = scmp.ne.s32.totalorder %s219, %s221
    %p225 = scmp.eq.s32.totalorder %s17, 0
    %p226 = por %p224, %p225
    %p227 = scmp.ne.s32.totalorder %s219, %s221
    %p228 = scmp.eq.s32.totalorder %s22, 1
    %p229 = por %p227, %p228
    %p230 = scmp.ne.s32.totalorder %s221, %s222
    %p231 = scmp.eq.s32.totalorder %s22, 0
    %p232 = por %p230, %p231
    %p233 = scmp.ne.s32.totalorder %s221, %s222
    %p234 = scmp.eq.s32.totalorder %s23, 1
    %p235 = por %p233, %p234
    %p237 = scmp.ne.s32.totalorder %s222, %s236
    %p238 = scmp.eq.s32.totalorder %s23, 0
    %p239 = por %p237, %p238
    %s241 = sadd.s32 %s240, 1
    %p244 = scmp.eq.s32.totalorder %s17, 1
    %p245 = scmp.ne.s32.totalorder %s240, %s242
    %p246 = scmp.eq.s32.totalorder %s17, 0
    %p247 = por %p245, %p246
    %p248 = scmp.ne.s32.totalorder %s240, %s242
    %p249 = scmp.eq.s32.totalorder %s22, 1
    %p250 = por %p248, %p249
    %p251 = scmp.ne.s32.totalorder %s242, %s243
    %p252 = scmp.eq.s32.totalorder %s22, 0
    %p253 = por %p251, %p252
    %p254 = scmp.ne.s32.totalorder %s242, %s243
    %p255 = scmp.eq.s32.totalorder %s23, 1
    %p256 = por %p254, %p255
    %p258 = scmp.ne.s32.totalorder %s243, %s257
    %p259 = scmp.eq.s32.totalorder %s23, 0
    %p260 = por %p258, %p259
    %s261 = ssub.s32 %s17, %s24
    %p262 = scmp.eq.s32.totalorder %s261, 0
    %s264 = sadd.s32 %s263, 1
    %s265 = scalar_select %p262, %s263, %s264
    %p268 = pneg %p262
    %p269 = scmp.eq.s32.totalorder %s17, 1
    %p270 = por %p268, %p269
    %p271 = scmp.ne.s32.totalorder %s263, %s266
    %p272 = scmp.eq.s32.totalorder %s17, 0
    %p273 = por %p271, %p272
    %p274 = scmp.ne.s32.totalorder %s263, %s266
    %p275 = scmp.eq.s32.totalorder %s22, 1
    %p276 = por %p274, %p275
    %p277 = scmp.ne.s32.totalorder %s266, %s267
    %p278 = scmp.eq.s32.totalorder %s22, 0
    %p279 = por %p277, %p278
    %p280 = scmp.ne.s32.totalorder %s266, %s267
    %p281 = scmp.eq.s32.totalorder %s23, 1
    %p282 = por %p280, %p281
    %p284 = scmp.ne.s32.totalorder %s267, %s283
    %p285 = scmp.eq.s32.totalorder %s23, 0
    %p286 = por %p284, %p285
    %p287 = scmp.le.s32.totalorder 1, %s17
    %p288 = scmp.lt.s32.totalorder %s17, 3
    %p289 = pnand %p287, %p288
    %p290 = pneg %p289
    // Predicated region
    $region9: #{_lambda_.1} parent=5 // pred_check
      _
    $region10: #{_lambda_.1} parent=5 // pred_check_branch
      %292 = sbr.rel (%p289) target = $region12
    $region11: #{_lambda_.1} parent=5 // pred_region
      %s293 = ssub.s32 %s17, 1
      // Predicated region
      $region13: #{_lambda_.1} parent=11 // pred_check
        %p294 = pneg %p64
      $region14: #{_lambda_.1} parent=11 // pred_check_branch
        %296 = sbr.rel (%p294) target = $region16
      $region15: #{_lambda_.1} parent=11 // pred_region
        _
      $region16: #{_lambda_.1} parent=11 // pred_fallthru
        _
      // Predicated region
      $region17: #{_lambda_.1} parent=11 // pred_check
        %p297 = pneg %p85
      $region18: #{_lambda_.1} parent=11 // pred_check_branch
        %299 = sbr.rel (%p297) target = $region20
      $region19: #{_lambda_.1} parent=11 // pred_region
        _
      $region20: #{_lambda_.1} parent=11 // pred_fallthru
        _
      // Predicated region
      $region21: #{_lambda_.1} parent=11 // pred_check
        %p300 = pneg %p106
      $region22: #{_lambda_.1} parent=11 // pred_check_branch
        %302 = sbr.rel (%p300) target = $region24
      $region23: #{_lambda_.1} parent=11 // pred_region
        _
      $region24: #{_lambda_.1} parent=11 // pred_fallthru
        _
      // Predicated region
      $region25: #{_lambda_.1} parent=11 // pred_check
        %p303 = pneg %p127
      $region26: #{_lambda_.1} parent=11 // pred_check_branch
        %305 = sbr.rel (%p303) target = $region28
      $region27: #{_lambda_.1} parent=11 // pred_region
        _
      $region28: #{_lambda_.1} parent=11 // pred_fallthru
        _
      // Predicated region
      $region29: #{_lambda_.1} parent=11 // pred_check
        %p306 = pneg %p148
      $region30: #{_lambda_.1} parent=11 // pred_check_branch
        %308 = sbr.rel (%p306) target = $region32
      $region31: #{_lambda_.1} parent=11 // pred_region
        _
      $region32: #{_lambda_.1} parent=11 // pred_fallthru
        _
      // Predicated region
      $region33: #{_lambda_.1} parent=11 // pred_check
        %p309 = pneg %p169
      $region34: #{_lambda_.1} parent=11 // pred_check_branch
        %311 = sbr.rel (%p309) target = $region36
      $region35: #{_lambda_.1} parent=11 // pred_region
        _
      $region36: #{_lambda_.1} parent=11 // pred_fallthru
        _
      // Predicated region
      $region37: #{_lambda_.1} parent=11 // pred_check
        %p312 = pneg %p190
      $region38: #{_lambda_.1} parent=11 // pred_check_branch
        %314 = sbr.rel (%p312) target = $region40
      $region39: #{_lambda_.1} parent=11 // pred_region
        _
      $region40: #{_lambda_.1} parent=11 // pred_fallthru
        _
      // Predicated region
      $region41: #{_lambda_.1} parent=11 // pred_check
        %p315 = pneg %p211
      $region42: #{_lambda_.1} parent=11 // pred_check_branch
        %317 = sbr.rel (%p315) target = $region44
      $region43: #{_lambda_.1} parent=11 // pred_region
        _
      $region44: #{_lambda_.1} parent=11 // pred_fallthru
        _
      // Predicated region
      $region45: #{_lambda_.1} parent=11 // pred_check
        %p318 = pneg %p232
      $region46: #{_lambda_.1} parent=11 // pred_check_branch
        %320 = sbr.rel (%p318) target = $region48
      $region47: #{_lambda_.1} parent=11 // pred_region
        _
      $region48: #{_lambda_.1} parent=11 // pred_fallthru
        _
      // Predicated region
      $region49: #{_lambda_.1} parent=11 // pred_check
        %p321 = pneg %p253
      $region50: #{_lambda_.1} parent=11 // pred_check_branch
        %323 = sbr.rel (%p321) target = $region52
      $region51: #{_lambda_.1} parent=11 // pred_region
        _
      $region52: #{_lambda_.1} parent=11 // pred_fallthru
        _
    $region12: #{_lambda_.1} parent=5 // pred_fallthru
      _
    %p324 = scmp.lt.s32.totalorder %s17, 2
    // Predicated region
    $region53: #{_lambda_.1} parent=5 // pred_check
      %p325 = pneg %p324
    $region54: #{_lambda_.1} parent=5 // pred_check_branch
      %327 = sbr.rel (%p325) target = $region56
    $region55: #{_lambda_.1} parent=5 // pred_region
      // Predicated region
      $region57: #{_lambda_.1} parent=55 // pred_check
        %p328 = pneg %p37
      $region58: #{_lambda_.1} parent=55 // pred_check_branch
        %330 = sbr.rel (%p328) target = $region60
      $region59: #{_lambda_.1} parent=55 // pred_region
        %p331 = scmp.lt.s32.totalorder %s17, 1
        %s332 = scalar_select %p331, %s17, 1
        %s333 = smul.addr %s332, 2
        %s334 = smul.addr %s333, 8
        %s335 = scalar_lea.vmem %s0, %s334
      $region60: #{_lambda_.1} parent=55 // pred_fallthru
        _
    $region56: #{_lambda_.1} parent=5 // pred_fallthru
      _
    %p336 = scmp.le.s32.totalorder 1, %s17
    %p337 = scmp.lt.s32.totalorder %s17, 3
    %p338 = pnand %p336, %p337
    %p339 = pneg %p338
    // Predicated region
    $region61: #{_lambda_.1} parent=5 // pred_check
      _
    $region62: #{_lambda_.1} parent=5 // pred_check_branch
      %341 = sbr.rel (%p338) target = $region64
    $region63: #{_lambda_.1} parent=5 // pred_region
      %s342 = ssub.s32 %s17, 1
      %p343 = scmp.lt.s32.totalorder %s22, 1
      %s344 = scalar_select %p343, %s22, 1
      %s345 = smul.addr %s344, 2
      %s346 = smul.addr %s345, 8
      %s347 = scalar_lea.vmem %s0, %s346
      %p348 = pneg %p43
      %p349 = pneg %p40
      %p350 = pneg %p64
      %p351 = pneg %p61
      %p352 = pneg %p85
      %p353 = pneg %p82
      %p354 = pneg %p106
      %p355 = pneg %p103
      %p356 = pneg %p127
      %p357 = pneg %p124
      %p358 = pneg %p148
      %p359 = pneg %p145
      %p360 = pneg %p169
      %p361 = pneg %p166
      %p362 = pneg %p190
      %p363 = pneg %p187
      %p364 = pneg %p211
      %p365 = pneg %p208
      %p366 = pneg %p232
      %p367 = pneg %p229
      %p368 = pneg %p253
      %p369 = pneg %p250
      %p370 = pneg %p279
      %p371 = pneg %p276
      %p372 = scmp.lt.s32.totalorder %s22, 1
      %s373 = scalar_select %p372, %s22, 1
      %s374 = smul.addr %s373, 8
      %s375 = scalar_lea.vmem %s11, %s374
      %p376 = scmp.lt.s32.totalorder %s22, 1
      %s377 = scalar_select %p376, %s22, 1
      %s378 = smul.addr %s377, 2
      %s379 = smul.addr %s378, 8
      %s380 = scalar_lea.vmem %s0, %s379
      %p381 = scmp.lt.s32.totalorder %s22, 1
      %s382 = scalar_select %p381, %s22, 1
      %s383 = smul.addr %s382, 8
      %s384 = scalar_lea.vmem %s11, %s383
      %v385 = vld [vmem:[%s380] sm:$0xff]
      %v386 = vld [vmem:[%s380 + $0x8] sm:$0xff]
      %v387 = vld [vmem:[%s1] sm:$0xff]
      %v388 = vld [vmem:[%s1 + $0x8] sm:$0xff]
      %v389 = vld [vmem:[%s1 + $0x10] sm:$0xff]
      %v390 = vld [vmem:[%s1 + $0x18] sm:$0xff]
      %v391 = vld [vmem:[%s1 + $0x20] sm:$0xff]
      %v392 = vld [vmem:[%s1 + $0x28] sm:$0xff]
      %v393 = vld [vmem:[%s1 + $0x30] sm:$0xff]
      %v394 = vld [vmem:[%s1 + $0x38] sm:$0xff]
      %v395 = vld [vmem:[%s1 + $0x40] sm:$0xff]
      %v396 = vld [vmem:[%s1 + $0x48] sm:$0xff]
      %v397 = vld [vmem:[%s1 + $0x50] sm:$0xff]
      %v398 = vld [vmem:[%s1 + $0x58] sm:$0xff]
      %v399 = vld [vmem:[%s1 + $0x60] sm:$0xff]
      %v400 = vld [vmem:[%s1 + $0x68] sm:$0xff]
      %v401 = vld [vmem:[%s1 + $0x70] sm:$0xff]
      %v402 = vld [vmem:[%s1 + $0x78] sm:$0xff]
      %v403 = vld [vmem:[%s1 + $0x80] sm:$0xff]
      %v404 = vld [vmem:[%s1 + $0x88] sm:$0xff]
      %v405 = vld [vmem:[%s1 + $0x90] sm:$0xff]
      %v406 = vld [vmem:[%s1 + $0x98] sm:$0xff]
      %v407 = vld [vmem:[%s1 + $0xa0] sm:$0xff]
      %v408 = vld [vmem:[%s1 + $0xa8] sm:$0xff]
      %v409 = vld [vmem:[%s1 + $0xb0] sm:$0xf]
      %v410 = vld [vmem:[%s2] sm:$0x1]
      %v412 = vlaneseq
      %v413 = vshrl.u32 %v412, 7
      %v414 = vsub.s32 0, %v413
      %v415 = vrot.slane %v410, %v414
      %vm417 = vcmask 424960
      %v419 = vsel %vm417, %v386, 0
      %vm421 = vcmask 1043456
      %v423 = vsel %vm421, %v409, 0
      %425 = vmatprep.subr.mxu0 0.0
      %426 = vmatpush1.msra.mxu0 %v387
      %427 = vmatprep.subr.mxu0 0.0
      %428 = vmatpush1.msra.mxu0 %v388
      %429 = vmatprep.subr.mxu0 0.0
      %430 = vmatpush1.msra.mxu0 %v389
      %431 = vmatprep.subr.mxu0 0.0
      %432 = vmatpush1.msra.mxu0 %v390
      %433 = vmatprep.subr.mxu0 0.0
      %434 = vmatpush1.msra.mxu0 %v391
      %435 = vmatprep.subr.mxu0 0.0
      %436 = vmatpush1.msra.mxu0 %v392
      %437 = vmatprep.subr.mxu0 0.0
      %438 = vmatpush1.msra.mxu0 %v393
      %439 = vmatprep.subr.mxu0 0.0
      %440 = vmatpush1.msra.mxu0 %v394
      %441 = vmatprep.subr.mxu0 0.0
      %442 = vmatpush1.msra.mxu0 %v395
      %443 = vmatprep.subr.mxu0 0.0
      %444 = vmatpush1.msra.mxu0 %v396
      %445 = vmatprep.subr.mxu0 0.0
      %446 = vmatpush1.msra.mxu0 %v397
      %447 = vmatprep.subr.mxu0 0.0
      %448 = vmatpush1.msra.mxu0 %v398
      %449 = vmatprep.subr.mxu0 0.0
      %450 = vmatpush1.msra.mxu0 %v399
      %451 = vmatprep.subr.mxu0 0.0
      %452 = vmatpush1.msra.mxu0 %v400
      %453 = vmatprep.subr.mxu0 0.0
      %454 = vmatpush1.msra.mxu0 %v401
      %455 = vmatprep.subr.mxu0 0.0
      %456 = vmatpush1.msra.mxu0 %v402
      %457 = vmatprep.subr.mxu0 0.0
      %458 = vmatpush1.msra.mxu0 %v403
      %459 = vmatprep.subr.mxu0 0.0
      %460 = vmatpush1.msra.mxu0 %v404
      %461 = vmatprep.subr.mxu0 0.0
      %462 = vmatpush1.msra.mxu0 %v405
      %463 = vmatprep.subr.mxu0 0.0
      %464 = vmatpush1.msra.mxu0 %v406
      %465 = vmatprep.subr.mxu0 0.0
      %466 = vmatpush1.msra.mxu0 %v407
      %467 = vmatprep.subr.mxu0 0.0
      %468 = vmatpush1.msra.mxu0 %v408
      %469 = vmatprep.subr.mxu0 0.0
      %470 = vmatpush1.msra.mxu0 %v423
      %471 = vmatprep.subr.mxu0 0.0
      %472 = vmatpush1.msra.mxu0 0.0
      %473 = vmatprep.subr.mxu0 0.0
      %474 = vmatpush1.msra.mxu0 0.0
      %475 = vmatprep.subr.mxu0 0.0
      %476 = vmatpush1.msra.mxu0 0.0
      %477 = vmatprep.subr.mxu0 0.0
      %478 = vmatpush1.msra.mxu0 0.0
      %479 = vmatprep.subr.mxu0 0.0
      %480 = vmatpush1.msra.mxu0 0.0
      %481 = vmatprep.subr.mxu0 0.0
      %482 = vmatpush1.msra.mxu0 0.0
      %483 = vmatprep.subr.mxu0 0.0
      %484 = vmatpush1.msra.mxu0 0.0
      %485 = vmatprep.subr.mxu0 0.0
      %486 = vmatpush1.msra.mxu0 0.0
      %487 = vmatprep.subr.mxu0 0.0
      %488 = vmatpush1.msra.mxu0 0.0
      %489 = vmatprep.mubr.f32.mxu0 %v419
      %490 = vmatmul.mubr.f32.gmra.mrb[0].mxu0 %v385
      %v491 = vpop.f32.mrb[0].mxu0
      %v492 = vadd.f32 %v415, %v491
      %v493 = vpop.f32.mrb[0].mxu0
      %494 = vdwg.mxu0
      %v495 = vmax.f32 %v492, 0.0
      %v496 = vld [vmem:[%s3] sm:$0xff]
      %v497 = vld [vmem:[%s3 + $0x8] sm:$0xff]
      %v498 = vld [vmem:[%s3 + $0x10] sm:$0xff]
      %v499 = vld [vmem:[%s3 + $0x18] sm:$0xf]
      %v500 = vld [vmem:[%s4] sm:$0x1]
      %v502 = vlaneseq
      %v503 = vshrl.u32 %v502, 7
      %v504 = vsub.s32 0, %v503
      %v505 = vrot.slane %v500, %v504
      %vm507 = vcmask 228352
      %v509 = vsel %vm507, %v495, 0
      %v512 = vsel %vm421, %v499, 0
      %514 = vmatprep.subr.mxu0 0.0
      %515 = vmatpush1.msra.mxu0 %v496
      %516 = vmatprep.subr.mxu0 0.0
      %517 = vmatpush1.msra.mxu0 %v497
      %518 = vmatprep.subr.mxu0 0.0
      %519 = vmatpush1.msra.mxu0 %v498
      %520 = vmatprep.subr.mxu0 0.0
      %521 = vmatpush1.msra.mxu0 %v512
      %522 = vmatprep.subr.mxu0 0.0
      %523 = vmatpush1.msra.mxu0 0.0
      %524 = vmatprep.subr.mxu0 0.0
      %525 = vmatpush1.msra.mxu0 0.0
      %526 = vmatprep.subr.mxu0 0.0
      %527 = vmatpush1.msra.mxu0 0.0
      %528 = vmatprep.subr.mxu0 0.0
      %529 = vmatpush1.msra.mxu0 0.0
      %530 = vmatprep.subr.mxu0 0.0
      %531 = vmatpush1.msra.mxu0 0.0
      %532 = vmatprep.subr.mxu0 0.0
      %533 = vmatpush1.msra.mxu0 0.0
      %534 = vmatprep.subr.mxu0 0.0
      %535 = vmatpush1.msra.mxu0 0.0
      %536 = vmatprep.subr.mxu0 0.0
      %537 = vmatpush1.msra.mxu0 0.0
      %538 = vmatprep.subr.mxu0 0.0
      %539 = vmatpush1.msra.mxu0 0.0
      %540 = vmatprep.subr.mxu0 0.0
      %541 = vmatpush1.msra.mxu0 0.0
      %542 = vmatprep.subr.mxu0 0.0
      %543 = vmatpush1.msra.mxu0 0.0
      %544 = vmatprep.subr.mxu0 0.0
      %545 = vmatpush1.msra.mxu0 0.0
      %546 = vmatprep.subr.mxu0 0.0
      %547 = vmatpush1.msra.mxu0 0.0
      %548 = vmatprep.subr.mxu0 0.0
      %549 = vmatpush1.msra.mxu0 0.0
      %550 = vmatprep.subr.mxu0 0.0
      %551 = vmatpush1.msra.mxu0 0.0
      %552 = vmatprep.subr.mxu0 0.0
      %553 = vmatpush1.msra.mxu0 0.0
      %554 = vmatprep.subr.mxu0 0.0
      %555 = vmatpush1.msra.mxu0 0.0
      %556 = vmatprep.subr.mxu0 0.0
      %557 = vmatpush1.msra.mxu0 0.0
      %558 = vmatprep.subr.mxu0 0.0
      %559 = vmatpush1.msra.mxu0 0.0
      %560 = vmatprep.subr.mxu0 0.0
      %561 = vmatpush1.msra.mxu0 0.0
      %562 = vmatprep.subr.mxu0 0.0
      %563 = vmatpush1.msra.mxu0 0.0
      %564 = vmatprep.subr.mxu0 0.0
      %565 = vmatpush1.msra.mxu0 0.0
      %566 = vmatprep.subr.mxu0 0.0
      %567 = vmatpush1.msra.mxu0 0.0
      %568 = vmatprep.subr.mxu0 0.0
      %569 = vmatpush1.msra.mxu0 0.0
      %570 = vmatprep.subr.mxu0 0.0
      %571 = vmatpush1.msra.mxu0 0.0
      %572 = vmatprep.subr.mxu0 0.0
      %573 = vmatpush1.msra.mxu0 0.0
      %574 = vmatprep.subr.mxu0 0.0
      %575 = vmatpush1.msra.mxu0 0.0
      %576 = vmatprep.subr.mxu0 0.0
      %577 = vmatpush1.msra.mxu0 0.0
      %578 = vmatprep.mubr.f32.mxu0 0.0
      %579 = vmatmul.mubr.f32.gmra.mrb[0].mxu0 %v509
      %v580 = vpop.f32.mrb[0].mxu0
      %v581 = vadd.f32 %v505, %v580
      %v582 = vpop.f32.mrb[0].mxu0
      %583 = vdwg.mxu0
      %v584 = vmax.f32 %v581, 0.0
      %v585 = vld [vmem:[%s5] sm:$0xff]
      %v586 = vld [vmem:[%s5 + $0x8] sm:$0xff]
      %v587 = vld [vmem:[%s5 + $0x10] sm:$0xff]
      %v588 = vld [vmem:[%s5 + $0x18] sm:$0xff]
      %v589 = vld [vmem:[%s5 + $0x20] sm:$0xf]
      %v590 = vld [vmem:[%s6] sm:$0x1]
      %v592 = vlaneseq
      %v593 = vshrl.u32 %v592, 7
      %v594 = vsub.s32 0, %v593
      %v595 = vrot.slane %v590, %v594
      %vm597 = vcmask 293888
      %v599 = vsel %vm597, %v584, 0
      %v602 = vsel %vm421, %v589, 0
      %604 = vmatprep.subr.mxu0 0.0
      %605 = vmatpush1.msra.mxu0 %v585
      %606 = vmatprep.subr.mxu0 0.0
      %607 = vmatpush1.msra.mxu0 %v586
      %608 = vmatprep.subr.mxu0 0.0
      %609 = vmatpush1.msra.mxu0 %v587
      %610 = vmatprep.subr.mxu0 0.0
      %611 = vmatpush1.msra.mxu0 %v588
      %612 = vmatprep.subr.mxu0 0.0
      %613 = vmatpush1.msra.mxu0 %v602
      %614 = vmatprep.subr.mxu0 0.0
      %615 = vmatpush1.msra.mxu0 0.0
      %616 = vmatprep.subr.mxu0 0.0
      %617 = vmatpush1.msra.mxu0 0.0
      %618 = vmatprep.subr.mxu0 0.0
      %619 = vmatpush1.msra.mxu0 0.0
      %620 = vmatprep.subr.mxu0 0.0
      %621 = vmatpush1.msra.mxu0 0.0
      %622 = vmatprep.subr.mxu0 0.0
      %623 = vmatpush1.msra.mxu0 0.0
      %624 = vmatprep.subr.mxu0 0.0
      %625 = vmatpush1.msra.mxu0 0.0
      %626 = vmatprep.subr.mxu0 0.0
      %627 = vmatpush1.msra.mxu0 0.0
      %628 = vmatprep.subr.mxu0 0.0
      %629 = vmatpush1.msra.mxu0 0.0
      %630 = vmatprep.subr.mxu0 0.0
      %631 = vmatpush1.msra.mxu0 0.0
      %632 = vmatprep.subr.mxu0 0.0
      %633 = vmatpush1.msra.mxu0 0.0
      %634 = vmatprep.subr.mxu0 0.0
      %635 = vmatpush1.msra.mxu0 0.0
      %636 = vmatprep.subr.mxu0 0.0
      %637 = vmatpush1.msra.mxu0 0.0
      %638 = vmatprep.subr.mxu0 0.0
      %639 = vmatpush1.msra.mxu0 0.0
      %640 = vmatprep.subr.mxu0 0.0
      %641 = vmatpush1.msra.mxu0 0.0
      %642 = vmatprep.subr.mxu0 0.0
      %643 = vmatpush1.msra.mxu0 0.0
      %644 = vmatprep.subr.mxu0 0.0
      %645 = vmatpush1.msra.mxu0 0.0
      %646 = vmatprep.subr.mxu0 0.0
      %647 = vmatpush1.msra.mxu0 0.0
      %648 = vmatprep.subr.mxu0 0.0
      %649 = vmatpush1.msra.mxu0 0.0
      %650 = vmatprep.subr.mxu0 0.0
      %651 = vmatpush1.msra.mxu0 0.0
      %652 = vmatprep.subr.mxu0 0.0
      %653 = vmatpush1.msra.mxu0 0.0
      %654 = vmatprep.subr.mxu0 0.0
      %655 = vmatpush1.msra.mxu0 0.0
      %656 = vmatprep.subr.mxu0 0.0
      %657 = vmatpush1.msra.mxu0 0.0
      %658 = vmatprep.subr.mxu0 0.0
      %659 = vmatpush1.msra.mxu0 0.0
      %660 = vmatprep.subr.mxu0 0.0
      %661 = vmatpush1.msra.mxu0 0.0
      %662 = vmatprep.subr.mxu0 0.0
      %663 = vmatpush1.msra.mxu0 0.0
      %664 = vmatprep.subr.mxu0 0.0
      %665 = vmatpush1.msra.mxu0 0.0
      %666 = vmatprep.subr.mxu0 0.0
      %667 = vmatpush1.msra.mxu0 0.0
      %668 = vmatprep.mubr.f32.mxu0 0.0
      %669 = vmatmul.mubr.f32.gmra.mrb[0].mxu0 %v599
      %v670 = vpop.f32.mrb[0].mxu0
      %v671 = vadd.f32 %v595, %v670
      %v672 = vpop.f32.mrb[0].mxu0
      %673 = vdwg.mxu0
      %v674 = vmax.f32 %v671, 0.0
      %v675 = vld [vmem:[%s7] sm:$0xff]
      %v676 = vld [vmem:[%s7 + $0x8] sm:$0xff]
      %v677 = vld [vmem:[%s7 + $0x10] sm:$0xff]
      %v678 = vld [vmem:[%s7 + $0x18] sm:$0xff]
      %v679 = vld [vmem:[%s7 + $0x20] sm:$0xf]
      %v680 = vld [vmem:[%s8] sm:$0x1]
      %v682 = vlaneseq
      %v683 = vshrl.u32 %v682, 7
      %v684 = vsub.s32 0, %v683
      %v685 = vrot.slane %v680, %v684
      %v688 = vsel %vm597, %v674, 0
      %v691 = vsel %vm421, %v679, 0
      %693 = vmatprep.subr.mxu0 0.0
      %694 = vmatpush1.msra.mxu0 %v675
      %695 = vmatprep.subr.mxu0 0.0
      %696 = vmatpush1.msra.mxu0 %v676
      %697 = vmatprep.subr.mxu0 0.0
      %698 = vmatpush1.msra.mxu0 %v677
      %699 = vmatprep.subr.mxu0 0.0
      %700 = vmatpush1.msra.mxu0 %v678
      %701 = vmatprep.subr.mxu0 0.0
      %702 = vmatpush1.msra.mxu0 %v691
      %703 = vmatprep.subr.mxu0 0.0
      %704 = vmatpush1.msra.mxu0 0.0
      %705 = vmatprep.subr.mxu0 0.0
      %706 = vmatpush1.msra.mxu0 0.0
      %707 = vmatprep.subr.mxu0 0.0
      %708 = vmatpush1.msra.mxu0 0.0
      %709 = vmatprep.subr.mxu0 0.0
      %710 = vmatpush1.msra.mxu0 0.0
      %711 = vmatprep.subr.mxu0 0.0
      %712 = vmatpush1.msra.mxu0 0.0
      %713 = vmatprep.subr.mxu0 0.0
      %714 = vmatpush1.msra.mxu0 0.0
      %715 = vmatprep.subr.mxu0 0.0
      %716 = vmatpush1.msra.mxu0 0.0
      %717 = vmatprep.subr.mxu0 0.0
      %718 = vmatpush1.msra.mxu0 0.0
      %719 = vmatprep.subr.mxu0 0.0
      %720 = vmatpush1.msra.mxu0 0.0
      %721 = vmatprep.subr.mxu0 0.0
      %722 = vmatpush1.msra.mxu0 0.0
      %723 = vmatprep.subr.mxu0 0.0
      %724 = vmatpush1.msra.mxu0 0.0
      %725 = vmatprep.subr.mxu0 0.0
      %726 = vmatpush1.msra.mxu0 0.0
      %727 = vmatprep.subr.mxu0 0.0
      %728 = vmatpush1.msra.mxu0 0.0
      %729 = vmatprep.subr.mxu0 0.0
      %730 = vmatpush1.msra.mxu0 0.0
      %731 = vmatprep.subr.mxu0 0.0
      %732 = vmatpush1.msra.mxu0 0.0
      %733 = vmatprep.subr.mxu0 0.0
      %734 = vmatpush1.msra.mxu0 0.0
      %735 = vmatprep.subr.mxu0 0.0
      %736 = vmatpush1.msra.mxu0 0.0
      %737 = vmatprep.subr.mxu0 0.0
      %738 = vmatpush1.msra.mxu0 0.0
      %739 = vmatprep.subr.mxu0 0.0
      %740 = vmatpush1.msra.mxu0 0.0
      %741 = vmatprep.subr.mxu0 0.0
      %742 = vmatpush1.msra.mxu0 0.0
      %743 = vmatprep.subr.mxu0 0.0
      %744 = vmatpush1.msra.mxu0 0.0
      %745 = vmatprep.subr.mxu0 0.0
      %746 = vmatpush1.msra.mxu0 0.0
      %747 = vmatprep.subr.mxu0 0.0
      %748 = vmatpush1.msra.mxu0 0.0
      %749 = vmatprep.subr.mxu0 0.0
      %750 = vmatpush1.msra.mxu0 0.0
      %751 = vmatprep.subr.mxu0 0.0
      %752 = vmatpush1.msra.mxu0 0.0
      %753 = vmatprep.subr.mxu0 0.0
      %754 = vmatpush1.msra.mxu0 0.0
      %755 = vmatprep.subr.mxu0 0.0
      %756 = vmatpush1.msra.mxu0 0.0
      %757 = vmatprep.mubr.f32.mxu0 0.0
      %758 = vmatmul.mubr.f32.gmra.mrb[0].mxu0 %v688
      %v759 = vpop.f32.mrb[0].mxu0
      %v760 = vadd.f32 %v685, %v759
      %v761 = vpop.f32.mrb[0].mxu0
      %762 = vdwg.mxu0
      %v763 = vmax.f32 %v760, 0.0
      %v764 = vld [vmem:[%s9] sm:$0xff]
      %v765 = vld [vmem:[%s9 + $0x8] sm:$0xff]
      %v766 = vld [vmem:[%s9 + $0x10] sm:$0xff]
      %v767 = vld [vmem:[%s9 + $0x18] sm:$0xff]
      %v768 = vld [vmem:[%s10] sm:$0x1]
      %v770 = vlaneseq
      %v771 = vshrl.u32 %v770, 7
      %v772 = vsub.s32 0, %v771
      %v773 = vrot.slane %v768, %v772
      %vm775 = vcmask 261120
      %v777 = vsel %vm775, %v763, 0
      %779 = vmatprep.subr.mxu0 0.0
      %780 = vmatpush1.msra.mxu0 %v764
      %781 = vmatprep.subr.mxu0 0.0
      %782 = vmatpush1.msra.mxu0 %v765
      %783 = vmatprep.subr.mxu0 0.0
      %784 = vmatpush1.msra.mxu0 %v766
      %785 = vmatprep.subr.mxu0 0.0
      %786 = vmatpush1.msra.mxu0 %v767
      %787 = vmatprep.subr.mxu0 0.0
      %788 = vmatpush1.msra.mxu0 0.0
      %789 = vmatprep.subr.mxu0 0.0
      %790 = vmatpush1.msra.mxu0 0.0
      %791 = vmatprep.subr.mxu0 0.0
      %792 = vmatpush1.msra.mxu0 0.0
      %793 = vmatprep.subr.mxu0 0.0
      %794 = vmatpush1.msra.mxu0 0.0
      %795 = vmatprep.subr.mxu0 0.0
      %796 = vmatpush1.msra.mxu0 0.0
      %797 = vmatprep.subr.mxu0 0.0
      %798 = vmatpush1.msra.mxu0 0.0
      %799 = vmatprep.subr.mxu0 0.0
      %800 = vmatpush1.msra.mxu0 0.0
      %801 = vmatprep.subr.mxu0 0.0
      %802 = vmatpush1.msra.mxu0 0.0
      %803 = vmatprep.subr.mxu0 0.0
      %804 = vmatpush1.msra.mxu0 0.0
      %805 = vmatprep.subr.mxu0 0.0
      %806 = vmatpush1.msra.mxu0 0.0
      %807 = vmatprep.subr.mxu0 0.0
      %808 = vmatpush1.msra.mxu0 0.0
      %809 = vmatprep.subr.mxu0 0.0
      %810 = vmatpush1.msra.mxu0 0.0
      %811 = vmatprep.subr.mxu0 0.0
      %812 = vmatpush1.msra.mxu0 0.0
      %813 = vmatprep.subr.mxu0 0.0
      %814 = vmatpush1.msra.mxu0 0.0
      %815 = vmatprep.subr.mxu0 0.0
      %816 = vmatpush1.msra.mxu0 0.0
      %817 = vmatprep.subr.mxu0 0.0
      %818 = vmatpush1.msra.mxu0 0.0
      %819 = vmatprep.subr.mxu0 0.0
      %820 = vmatpush1.msra.mxu0 0.0
      %821 = vmatprep.subr.mxu0 0.0
      %822 = vmatpush1.msra.mxu0 0.0
      %823 = vmatprep.subr.mxu0 0.0
      %824 = vmatpush1.msra.mxu0 0.0
      %825 = vmatprep.subr.mxu0 0.0
      %826 = vmatpush1.msra.mxu0 0.0
      %827 = vmatprep.subr.mxu0 0.0
      %828 = vmatpush1.msra.mxu0 0.0
      %829 = vmatprep.subr.mxu0 0.0
      %830 = vmatpush1.msra.mxu0 0.0
      %831 = vmatprep.subr.mxu0 0.0
      %832 = vmatpush1.msra.mxu0 0.0
      %833 = vmatprep.subr.mxu0 0.0
      %834 = vmatpush1.msra.mxu0 0.0
      %835 = vmatprep.subr.mxu0 0.0
      %836 = vmatpush1.msra.mxu0 0.0
      %837 = vmatprep.subr.mxu0 0.0
      %838 = vmatpush1.msra.mxu0 0.0
      %839 = vmatprep.subr.mxu0 0.0
      %840 = vmatpush1.msra.mxu0 0.0
      %841 = vmatprep.subr.mxu0 0.0
      %842 = vmatpush1.msra.mxu0 0.0
      %843 = vmatprep.mubr.f32.mxu0 0.0
      %844 = vmatmul.mubr.f32.gmra.mrb[0].mxu0 %v777
      %v845 = vpop.f32.mrb[0].mxu0
      %v846 = vadd.f32 %v773, %v845
      %v847 = vpop.f32.mrb[0].mxu0
      %848 = vdwg.mxu0
      %vm849 = vcmp.gt.f32.partialorder %v846, 20.0
      %v850 = vmin.f32 %v846, 20.0
      %v851 = vmul.f32 %v850, 1.442695
      %v852 = vpow.pop %v851
      %v853 = vadd.f32 %v852, 1.0
      %v854 = vlog2.pop %v853
      %v855 = vmul.f32 %v854, 0.6931472
      %v856 = vsel %vm849, %v846, %v855
      %v857 = vlaneseq
      %v858 = vand.u32 %v857, 127
      %vm859 = vcmp.ge.s32.totalorder %v858, 8
      %v860 = vsel %vm859, %v856, %v846
      %vm861 = vcmask 130048
      %862 = vst.msk [vmem:[%s384] sm:$0xff] %vm861, %v860
      %p863 = scmp.lt.s32.totalorder %s22, 1
      %s864 = scalar_select %p863, %s22, 1
      %s865 = smul.addr %s864, 8
      %s866 = scalar_lea.vmem %s11, %s865
      // Predicated region
      $region65: #{_lambda_.1} parent=63 // pred_check
        %p867 = pneg %p276
      $region66: #{_lambda_.1} parent=63 // pred_check_branch
        %869 = sbr.rel (%p867) target = $region68
      $region67: #{_lambda_.1} parent=63 // pred_region
        _
      $region68: #{_lambda_.1} parent=63 // pred_fallthru
        _
    $region64: #{_lambda_.1} parent=5 // pred_fallthru
      _
    %p870 = scmp.le.s32.totalorder 2, %s17
    // Predicated region
    $region69: #{_lambda_.1} parent=5 // pred_check
      %p871 = pneg %p870
    $region70: #{_lambda_.1} parent=5 // pred_check_branch
      %873 = sbr.rel (%p871) target = $region72
    $region71: #{_lambda_.1} parent=5 // pred_region
      %s874 = ssub.s32 %s17, 2
      // Predicated region
      $region73: #{_lambda_.1} parent=71 // pred_check
        %p875 = pneg %p282
      $region74: #{_lambda_.1} parent=71 // pred_check_branch
        %877 = sbr.rel (%p875) target = $region76
      $region75: #{_lambda_.1} parent=71 // pred_region
        %p878 = scmp.lt.s32.totalorder %s23, 1
        %s879 = scalar_select %p878, %s23, 1
        %s880 = smul.addr %s879, 8
        %s881 = scalar_lea.vmem %s11, %s880
      $region76: #{_lambda_.1} parent=71 // pred_fallthru
        _
    $region72: #{_lambda_.1} parent=5 // pred_fallthru
      _
  $region6: #{_lambda_.1} parent=0 // loop_footer
    %s21 = sadd.s32 1, %s17
  $region7: #{_lambda_.1} parent=0 // loop_footer_branch
    %16 = sbr.rel target = $region3
  $region8: #{_lambda_.1} parent=0 // loop_exit
    _

</llo_original>
